<compile_context>
chip_gen: v5e
topology: v5e:2x2
jax: 0.10.0
libtpu: 0.0.40
codegen_flags: <defaults>
</compile_context>

<pallas_src>
import math
import jax
import jax.numpy as jnp
from jax.experimental import pallas as pl
from jax.experimental.pallas import tpu as pltpu


def _round_up(x, m):
    return ((x + m - 1) // m) * m


def _cdiv(a, b):
    return -(-a // b)


def _ffn_kernel(x_ref, w1_ref, b1_ref, w2_ref, b2_ref, o_ref, acc_ref):
    # x_ref : [TM, H] f32   w1_ref: [H, TP] bf16   b1_ref: [1, TP] f32
    # w2_ref: [TP, H] bf16  b2_ref: [1, H]  f32
    # o_ref : [TM, H] bf16  acc_ref: [TM, H] f32 scratch (fc_2 accumulator)
    p = pl.program_id(1)

    @pl.when(p == 0)
    def _():
        acc_ref[...] = jnp.zeros_like(acc_ref)

    # fc_1 pf-block (MXU, bf16 operands / f32 acc) + bias + ReLU; cast the
    # ReLU result straight to bf16 so only one TM x TP hidden copy stays live.
    h = jnp.dot(x_ref[...].astype(jnp.bfloat16), w1_ref[...],
                preferred_element_type=jnp.float32)
    h = jnp.maximum(h + b1_ref[...], 0.0).astype(jnp.bfloat16)

    # dropout: inference mode -> identity
    # fc_2 partial product for this pf block, accumulated in f32.
    acc_ref[...] += jnp.dot(h, w2_ref[...], preferred_element_type=jnp.float32)

    @pl.when(p == pl.num_programs(1) - 1)
    def _():
        o_ref[...] = (acc_ref[...] + b2_ref[...]).astype(o_ref.dtype)


def prepare_params(w1, b1, w2, b2, *, tp=2048):
    """Pad / cast the FFN parameters ONCE (not per forward call).

    w1: [hid, pf], w2: [pf, hid] (pre-transposed vs nn.Linear storage),
    biases b1: [pf] or [1, pf], b2: [hid] or [1, hid].
    Feature dims are padded to lane-dense multiples of 128; pf is additionally
    padded to a multiple of the pf tile TP.  Weights -> bf16, biases -> f32.
    """
    hid, pf = w1.shape
    H = _round_up(hid, 128)
    P0 = _round_up(pf, 128)
    n_p = _cdiv(P0, int(tp))
    TP = _round_up(_cdiv(P0, n_p), 128)
    P = n_p * TP

    w1p = jnp.pad(jnp.asarray(w1), ((0, H - hid), (0, P - pf))).astype(jnp.bfloat16)
    w2p = jnp.pad(jnp.asarray(w2), ((0, P - pf), (0, H - hid))).astype(jnp.bfloat16)
    b1p = jnp.pad(jnp.reshape(b1, (1, pf)), ((0, 0), (0, P - pf))).astype(jnp.float32)
    b2p = jnp.pad(jnp.reshape(b2, (1, hid)), ((0, 0), (0, H - hid))).astype(jnp.float32)
    return dict(w1=w1p, b1=b1p, w2=w2p, b2=b2p,
                hid=hid, pf=pf, H=H, P=P, TP=TP)


def positionwise_feedforward(x, params, *, tm=512, single_buffer_weights=True):
    """x: [batch, seq, hid] -> [batch, seq, hid]  (params from prepare_params)."""
    batch, seq, hid = x.shape
    assert hid == params["hid"], (hid, params["hid"])
    H, P, TP = params["H"], params["P"], params["TP"]
    w1, b1, w2, b2 = params["w1"], params["b1"], params["w2"], params["b2"]
    m = batch * seq
    n_p = P // TP

    # Row tile: multiple of 16 (bf16 output sublane packing), not beyond data.
    TM = _round_up(min(int(tm), _round_up(m, 16)), 16)
    # Prefer >= 2 row tiles so v7x megacore can shard the "parallel" axis.
    if _cdiv(m, TM) == 1 and TM >= 32:
        TM = _round_up(_cdiv(TM, 2), 16)
    M = _round_up(m, TM)
    n_m = M // TM

    # x keeps its input dtype (f32): the tile is DMA'd as-is and cast to bf16
    # on the VPU inside the kernel (no separate wrapper cast pass over HBM).
    x2d = x.reshape(m, hid)
    if (M, H) != (m, hid):
        x2d = jnp.pad(x2d, ((0, M - m), (0, H - hid)))
    xbytes = x2d.dtype.itemsize

    cost = pl.CostEstimate(
        flops=4 * m * hid * params["pf"],            # two matmuls
        transcendentals=0,
        bytes_accessed=(M * H * xbytes + (H * P + P * H) * 2
                        + (P + H) * 4 + M * H * 2),
    )

    # Single-buffer operands whose index map is constant over the grid (the
    # pipeline never re-DMAs them; a second buffer is pure VMEM waste).
    resident = dict(pipeline_mode=pl.Buffered(1)) if single_buffer_weights else {}
    w_resident = resident if n_p == 1 else {}
    w_bufs = 1 if (single_buffer_weights and n_p == 1) else 2

    vmem_est = int(1.2 * (
        2 * TM * H * xbytes                 # x blocks (double-buffered)
        + 2 * TM * H * 2                    # out blocks (bf16, double-buffered)
        + w_bufs * (H * TP + TP * H) * 2    # w1 / w2 blocks
        + TM * H * 4                        # f32 accumulator scratch
        + TM * TP * 6                       # live hidden tile (f32 + bf16)
        + 16 * (TP + H) * 4))               # biases
    try:
        cap = int(pltpu.get_tpu_info().vmem_capacity_bytes)
    except Exception:
        cap = 64 * 1024 * 1024              # conservative (v7x per-TC) fallback
    vmem_limit = int(min(max(vmem_est, 32 * 1024 * 1024), (cap * 7) // 8))

    out2d = pl.pallas_call(
        _ffn_kernel,
        out_shape=jax.ShapeDtypeStruct((M, H), jnp.bfloat16),
        grid_spec=pltpu.PrefetchScalarGridSpec(
            num_scalar_prefetch=0,
            grid=(n_m, n_p),                                     # reduction last
            in_specs=[
                pl.BlockSpec((TM, H), lambda i, p: (i, 0)),      # x rows: tiled
                pl.BlockSpec((H, TP), lambda i, p: (0, p), **w_resident),  # w1
                pl.BlockSpec((1, TP), lambda i, p: (0, p), **w_resident),  # b1
                pl.BlockSpec((TP, H), lambda i, p: (p, 0), **w_resident),  # w2
                pl.BlockSpec((1, H), lambda i, p: (0, 0), **resident),     # b2
            ],
            out_specs=pl.BlockSpec((TM, H), lambda i, p: (i, 0)),
            scratch_shapes=[pltpu.VMEM((TM, H), jnp.float32)],
        ),
        compiler_params=pltpu.CompilerParams(
            dimension_semantics=("parallel", "arbitrary"),
            vmem_limit_bytes=vmem_limit,
        ),
        cost_estimate=cost,
    )(x2d, w1, b1, w2, b2)

    # Un-pad + cast back to the input dtype (fused slice/convert in XLA).
    return out2d[:m, :hid].astype(x.dtype).reshape(batch, seq, hid)


def init_params(key, hid_dim, pf_dim, dtype=jnp.float32):
    """Deterministic init matching nn.Linear shapes (stored transposed)."""
    k1, k2, k3, k4 = jax.random.split(key, 4)
    bound1 = 1.0 / math.sqrt(hid_dim)
    bound2 = 1.0 / math.sqrt(pf_dim)
    # fc_1: nn.Linear(hid, pf) -> weight [pf, hid]; stored as [hid, pf]
    w1 = jax.random.uniform(k1, (hid_dim, pf_dim), dtype, -bound1, bound1)
    b1 = jax.random.uniform(k2, (1, pf_dim), dtype, -bound1, bound1)
    # fc_2: nn.Linear(pf, hid) -> weight [hid, pf]; stored as [pf, hid]
    w2 = jax.random.uniform(k3, (pf_dim, hid_dim), dtype, -bound2, bound2)
    b2 = jax.random.uniform(k4, (1, hid_dim), dtype, -bound2, bound2)
    return w1, b1, w2, b2


if __name__ == "__main__":
    hid_dim, pf_dim = 32, 64
    batch, seq = 2, 8

    key = jax.random.PRNGKey(0)
    kx, kp = jax.random.split(key)
    x = jax.random.normal(kx, (batch, seq, hid_dim), jnp.float32)
    w1, b1, w2, b2 = init_params(kp, hid_dim, pf_dim)
    params = prepare_params(w1, b1, w2, b2)

    try:
        out = jax.block_until_ready(positionwise_feedforward(x, params))
    except Exception:
        # TODO(synk): fall back to double-buffered weights if this jax build
        # rejects pipeline_mode=pl.Buffered(1).
        out = jax.block_until_ready(
            positionwise_feedforward(x, params, single_buffer_weights=False))

    # Plain-JAX f32 reference.  Kernel uses bf16 MXU operands / bf16 output
    # with f32 accumulation, so allow a modest tolerance.
    ref = jnp.maximum(x.reshape(-1, hid_dim) @ w1 + b1, 0.0) @ w2 + b2
    ref = ref.reshape(batch, seq, hid_dim)
    assert out.shape == (batch, seq, hid_dim)
    assert out.dtype == x.dtype
    assert jnp.allclose(out, ref, atol=3e-2, rtol=3e-2), (
        float(jnp.max(jnp.abs(out - ref))))

    # TODO(synk): dropout is treated as identity (inference mode); training-mode
    # dropout would need pltpu.prng_seed / prng_random_bits masking in-kernel.
    print("KERNEL_OK")
</pallas_src>

<mosaic_0001>
module attributes {stable_mosaic.version = 11 : i64} {
  func.func @_ffn_kernel(%arg0: i32, %arg1: i32, %arg2: memref<16x128xf32, #tpu.memory_space<vmem>>, %arg3: memref<128x128xbf16, #tpu.memory_space<vmem>>, %arg4: memref<1x128xf32, #tpu.memory_space<vmem>>, %arg5: memref<128x128xbf16, #tpu.memory_space<vmem>>, %arg6: memref<1x128xf32, #tpu.memory_space<vmem>>, %arg7: memref<16x128xbf16, #tpu.memory_space<vmem>>, %arg8: memref<16x128xf32, #tpu.memory_space<vmem>>) attributes {dimension_semantics = [#tpu.dimension_semantics<parallel>, #tpu.dimension_semantics<arbitrary>], iteration_bounds = array<i64: 1, 1>, scalar_prefetch = 0 : i64, scratch_operands = 1 : i64, tpu.core_type = #tpu.core_type<tc>, window_params = [{transform_indices = @transform_0, window_bounds = array<i64: 16, 128>}, {pipeline_mode = #tpu.pipeline_mode<synchronous>, transform_indices = @transform_1, window_bounds = array<i64: 128, 128>}, {pipeline_mode = #tpu.pipeline_mode<synchronous>, transform_indices = @transform_2, window_bounds = array<i64: 1, 128>}, {pipeline_mode = #tpu.pipeline_mode<synchronous>, transform_indices = @transform_3, window_bounds = array<i64: 128, 128>}, {pipeline_mode = #tpu.pipeline_mode<synchronous>, transform_indices = @transform_4, window_bounds = array<i64: 1, 128>}, {transform_indices = @transform_5, window_bounds = array<i64: 16, 128>}]} {
    %c0_i32 = arith.constant 0 : i32
    %0 = arith.cmpi eq, %arg1, %c0_i32 : i32
    %1 = arith.extui %0 : i1 to i32
    %c0_i32_0 = arith.constant 0 : i32
    %2 = arith.cmpi ne, %1, %c0_i32_0 : i32
    scf.if %2 {
      %cst_16 = arith.constant 0.000000e+00 : f32
      %21 = vector.broadcast %cst_16 : f32 to vector<16x128xf32>
      %c0_17 = arith.constant 0 : index
      %c0_18 = arith.constant 0 : index
      %22 = vector.load %arg8[%c0_17, %c0_18] : memref<16x128xf32, #tpu.memory_space<vmem>>, vector<16x128xf32>
      tpu.vector_store %arg8[%c0_17, %c0_18], %21 {strides = array<i32>} : memref<16x128xf32, #tpu.memory_space<vmem>>, vector<16x128xf32>,
    } else {
    }
    %c0 = arith.constant 0 : index
    %c0_1 = arith.constant 0 : index
    %3 = vector.load %arg2[%c0, %c0_1] : memref<16x128xf32, #tpu.memory_space<vmem>>, vector<16x128xf32>
    %4 = arith.truncf %3 : vector<16x128xf32> to vector<16x128xbf16>
    %c0_2 = arith.constant 0 : index
    %c0_3 = arith.constant 0 : index
    %5 = vector.load %arg3[%c0_2, %c0_3] : memref<128x128xbf16, #tpu.memory_space<vmem>>, vector<128x128xbf16>
    %cst = arith.constant dense<0.000000e+00> : vector<16x128xf32>
    %6 = tpu.matmul %4, %5, %cst {dimension_numbers = #tpu.dot_dimension_numbers<[1], [0], [0], [1], [0, 0, 1, 1], [], []>} : vector<16x128xbf16>, vector<128x128xbf16>, vector<16x128xf32> -> vector<16x128xf32>
    %c0_4 = arith.constant 0 : index
    %c0_5 = arith.constant 0 : index
    %7 = vector.load %arg4[%c0_4, %c0_5] : memref<1x128xf32, #tpu.memory_space<vmem>>, vector<1x128xf32>
    %8 = vector.broadcast %7 : vector<1x128xf32> to vector<16x128xf32>
    %9 = arith.addf %6, %8 : vector<16x128xf32>
    %cst_6 = arith.constant 0.000000e+00 : f32
    %10 = vector.broadcast %cst_6 : f32 to vector<16x128xf32>
    %11 = arith.maximumf %9, %10 : vector<16x128xf32>
    %12 = arith.truncf %11 : vector<16x128xf32> to vector<16x128xbf16>
    %c0_7 = arith.constant 0 : index
    %c0_8 = arith.constant 0 : index
    %13 = vector.load %arg8[%c0_7, %c0_8] : memref<16x128xf32, #tpu.memory_space<vmem>>, vector<16x128xf32>
    %c0_9 = arith.constant 0 : index
    %c0_10 = arith.constant 0 : index
    %14 = vector.load %arg5[%c0_9, %c0_10] : memref<128x128xbf16, #tpu.memory_space<vmem>>, vector<128x128xbf16>
    %cst_11 = arith.constant dense<0.000000e+00> : vector<16x128xf32>
    %15 = tpu.matmul %12, %14, %cst_11 {dimension_numbers = #tpu.dot_dimension_numbers<[1], [0], [0], [1], [0, 0, 1, 1], [], []>} : vector<16x128xbf16>, vector<128x128xbf16>, vector<16x128xf32> -> vector<16x128xf32>
    %16 = arith.addf %13, %15 : vector<16x128xf32>
    %c0_12 = arith.constant 0 : index
    %c0_13 = arith.constant 0 : index
    %17 = vector.load %arg8[%c0_12, %c0_13] : memref<16x128xf32, #tpu.memory_space<vmem>>, vector<16x128xf32>
    tpu.vector_store %arg8[%c0_12, %c0_13], %16 {strides = array<i32>} : memref<16x128xf32, #tpu.memory_space<vmem>>, vector<16x128xf32>,
    %c0_i32_14 = arith.constant 0 : i32
    %18 = arith.cmpi eq, %arg1, %c0_i32_14 : i32
    %19 = arith.extui %18 : i1 to i32
    %c0_i32_15 = arith.constant 0 : i32
    %20 = arith.cmpi ne, %19, %c0_i32_15 : i32
    scf.if %20 {
      %c0_16 = arith.constant 0 : index
      %c0_17 = arith.constant 0 : index
      %21 = vector.load %arg8[%c0_16, %c0_17] : memref<16x128xf32, #tpu.memory_space<vmem>>, vector<16x128xf32>
      %c0_18 = arith.constant 0 : index
      %c0_19 = arith.constant 0 : index
      %22 = vector.load %arg6[%c0_18, %c0_19] : memref<1x128xf32, #tpu.memory_space<vmem>>, vector<1x128xf32>
      %23 = vector.broadcast %22 : vector<1x128xf32> to vector<16x128xf32>
      %24 = arith.addf %21, %23 : vector<16x128xf32>
      %25 = arith.truncf %24 : vector<16x128xf32> to vector<16x128xbf16>
      %c0_20 = arith.constant 0 : index
      %c0_21 = arith.constant 0 : index
      %26 = vector.load %arg7[%c0_20, %c0_21] : memref<16x128xbf16, #tpu.memory_space<vmem>>, vector<16x128xbf16>
      tpu.vector_store %arg7[%c0_20, %c0_21], %25 {strides = array<i32>} : memref<16x128xbf16, #tpu.memory_space<vmem>>, vector<16x128xbf16>,
    } else {
    }
    return
  }
  func.func @transform_0(%arg0: i32, %arg1: i32) -> (i32, i32) {
    %c0_i32 = arith.constant 0 : i32
    %c0_i32_0 = arith.constant 0 : i32
    return %arg0, %c0_i32 : i32, i32
  }
  func.func @transform_1(%arg0: i32, %arg1: i32) -> (i32, i32) {
    %c0_i32 = arith.constant 0 : i32
    %c0_i32_0 = arith.constant 0 : i32
    return %c0_i32, %arg1 : i32, i32
  }
  func.func @transform_2(%arg0: i32, %arg1: i32) -> (i32, i32) {
    %c0_i32 = arith.constant 0 : i32
    %c0_i32_0 = arith.constant 0 : i32
    return %c0_i32, %arg1 : i32, i32
  }
  func.func @transform_3(%arg0: i32, %arg1: i32) -> (i32, i32) {
    %c0_i32 = arith.constant 0 : i32
    %c0_i32_0 = arith.constant 0 : i32
    return %arg1, %c0_i32 : i32, i32
  }
  func.func @transform_4(%arg0: i32, %arg1: i32) -> (i32, i32) {
    %c0_i32 = arith.constant 0 : i32
    %c0_i32_0 = arith.constant 0 : i32
    %c0_i32_1 = arith.constant 0 : i32
    return %c0_i32, %c0_i32_0 : i32, i32
  }
  func.func @transform_5(%arg0: i32, %arg1: i32) -> (i32, i32) {
    %c0_i32 = arith.constant 0 : i32
    %c0_i32_0 = arith.constant 0 : i32
    return %arg0, %c0_i32 : i32, i32
  }
}

module attributes {stable_mosaic.version = 11 : i64} {
  func.func @_ffn_kernel(%arg0: i32, %arg1: i32, %arg2: memref<16x128xf32, #tpu.memory_space<vmem>>, %arg3: memref<128x128xbf16, #tpu.memory_space<vmem>>, %arg4: memref<1x128xf32, #tpu.memory_space<vmem>>, %arg5: memref<128x128xbf16, #tpu.memory_space<vmem>>, %arg6: memref<1x128xf32, #tpu.memory_space<vmem>>, %arg7: memref<16x128xbf16, #tpu.memory_space<vmem>>, %arg8: memref<16x128xf32, #tpu.memory_space<vmem>>) attributes {dimension_semantics = [#tpu.dimension_semantics<parallel>, #tpu.dimension_semantics<arbitrary>], iteration_bounds = array<i64: 1, 1>, scalar_prefetch = 0 : i64, scratch_operands = 1 : i64, tpu.core_type = #tpu.core_type<tc>, window_params = [{transform_indices = @transform_0, window_bounds = array<i64: 16, 128>}, {transform_indices = @transform_1, window_bounds = array<i64: 128, 128>}, {transform_indices = @transform_2, window_bounds = array<i64: 1, 128>}, {transform_indices = @transform_3, window_bounds = array<i64: 128, 128>}, {pipeline_mode = #tpu.pipeline_mode<synchronous>, transform_indices = @transform_4, window_bounds = array<i64: 1, 128>}, {transform_indices = @transform_5, window_bounds = array<i64: 16, 128>}]} {
    %c0_i32 = arith.constant 0 : i32
    %0 = arith.cmpi eq, %arg1, %c0_i32 : i32
    %1 = arith.extui %0 : i1 to i32
    %c0_i32_0 = arith.constant 0 : i32
    %2 = arith.cmpi ne, %1, %c0_i32_0 : i32
    scf.if %2 {
      %cst_16 = arith.constant 0.000000e+00 : f32
      %21 = vector.broadcast %cst_16 : f32 to vector<16x128xf32>
      %c0_17 = arith.constant 0 : index
      %c0_18 = arith.constant 0 : index
      %22 = vector.load %arg8[%c0_17, %c0_18] : memref<16x128xf32, #tpu.memory_space<vmem>>, vector<16x128xf32>
      tpu.vector_store %arg8[%c0_17, %c0_18], %21 {strides = array<i32>} : memref<16x128xf32, #tpu.memory_space<vmem>>, vector<16x128xf32>,
    } else {
    }
    %c0 = arith.constant 0 : index
    %c0_1 = arith.constant 0 : index
    %3 = vector.load %arg2[%c0, %c0_1] : memref<16x128xf32, #tpu.memory_space<vmem>>, vector<16x128xf32>
    %4 = arith.truncf %3 : vector<16x128xf32> to vector<16x128xbf16>
    %c0_2 = arith.constant 0 : index
    %c0_3 = arith.constant 0 : index
    %5 = vector.load %arg3[%c0_2, %c0_3] : memref<128x128xbf16, #tpu.memory_space<vmem>>, vector<128x128xbf16>
    %cst = arith.constant dense<0.000000e+00> : vector<16x128xf32>
    %6 = tpu.matmul %4, %5, %cst {dimension_numbers = #tpu.dot_dimension_numbers<[1], [0], [0], [1], [0, 0, 1, 1], [], []>} : vector<16x128xbf16>, vector<128x128xbf16>, vector<16x128xf32> -> vector<16x128xf32>
    %c0_4 = arith.constant 0 : index
    %c0_5 = arith.constant 0 : index
    %7 = vector.load %arg4[%c0_4, %c0_5] : memref<1x128xf32, #tpu.memory_space<vmem>>, vector<1x128xf32>
    %8 = vector.broadcast %7 : vector<1x128xf32> to vector<16x128xf32>
    %9 = arith.addf %6, %8 : vector<16x128xf32>
    %cst_6 = arith.constant 0.000000e+00 : f32
    %10 = vector.broadcast %cst_6 : f32 to vector<16x128xf32>
    %11 = arith.maximumf %9, %10 : vector<16x128xf32>
    %12 = arith.truncf %11 : vector<16x128xf32> to vector<16x128xbf16>
    %c0_7 = arith.constant 0 : index
    %c0_8 = arith.constant 0 : index
    %13 = vector.load %arg8[%c0_7, %c0_8] : memref<16x128xf32, #tpu.memory_space<vmem>>, vector<16x128xf32>
    %c0_9 = arith.constant 0 : index
    %c0_10 = arith.constant 0 : index
    %14 = vector.load %arg5[%c0_9, %c0_10] : memref<128x128xbf16, #tpu.memory_space<vmem>>, vector<128x128xbf16>
    %cst_11 = arith.constant dense<0.000000e+00> : vector<16x128xf32>
    %15 = tpu.matmul %12, %14, %cst_11 {dimension_numbers = #tpu.dot_dimension_numbers<[1], [0], [0], [1], [0, 0, 1, 1], [], []>} : vector<16x128xbf16>, vector<128x128xbf16>, vector<16x128xf32> -> vector<16x128xf32>
    %16 = arith.addf %13, %15 : vector<16x128xf32>
    %c0_12 = arith.constant 0 : index
    %c0_13 = arith.constant 0 : index
    %17 = vector.load %arg8[%c0_12, %c0_13] : memref<16x128xf32, #tpu.memory_space<vmem>>, vector<16x128xf32>
    tpu.vector_store %arg8[%c0_12, %c0_13], %16 {strides = array<i32>} : memref<16x128xf32, #tpu.memory_space<vmem>>, vector<16x128xf32>,
    %c0_i32_14 = arith.constant 0 : i32
    %18 = arith.cmpi eq, %arg1, %c0_i32_14 : i32
    %19 = arith.extui %18 : i1 to i32
    %c0_i32_15 = arith.constant 0 : i32
    %20 = arith.cmpi ne, %19, %c0_i32_15 : i32
    scf.if %20 {
      %c0_16 = arith.constant 0 : index
      %c0_17 = arith.constant 0 : index
      %21 = vector.load %arg8[%c0_16, %c0_17] : memref<16x128xf32, #tpu.memory_space<vmem>>, vector<16x128xf32>
      %c0_18 = arith.constant 0 : index
      %c0_19 = arith.constant 0 : index
      %22 = vector.load %arg6[%c0_18, %c0_19] : memref<1x128xf32, #tpu.memory_space<vmem>>, vector<1x128xf32>
      %23 = vector.broadcast %22 : vector<1x128xf32> to vector<16x128xf32>
      %24 = arith.addf %21, %23 : vector<16x128xf32>
      %25 = arith.truncf %24 : vector<16x128xf32> to vector<16x128xbf16>
      %c0_20 = arith.constant 0 : index
      %c0_21 = arith.constant 0 : index
      %26 = vector.load %arg7[%c0_20, %c0_21] : memref<16x128xbf16, #tpu.memory_space<vmem>>, vector<16x128xbf16>
      tpu.vector_store %arg7[%c0_20, %c0_21], %25 {strides = array<i32>} : memref<16x128xbf16, #tpu.memory_space<vmem>>, vector<16x128xbf16>,
    } else {
    }
    return
  }
  func.func @transform_0(%arg0: i32, %arg1: i32) -> (i32, i32) {
    %c0_i32 = arith.constant 0 : i32
    %c0_i32_0 = arith.constant 0 : i32
    return %arg0, %c0_i32 : i32, i32
  }
  func.func @transform_1(%arg0: i32, %arg1: i32) -> (i32, i32) {
    %c0_i32 = arith.constant 0 : i32
    %c0_i32_0 = arith.constant 0 : i32
    return %c0_i32, %arg1 : i32, i32
  }
  func.func @transform_2(%arg0: i32, %arg1: i32) -> (i32, i32) {
    %c0_i32 = arith.constant 0 : i32
    %c0_i32_0 = arith.constant 0 : i32
    return %c0_i32, %arg1 : i32, i32
  }
  func.func @transform_3(%arg0: i32, %arg1: i32) -> (i32, i32) {
    %c0_i32 = arith.constant 0 : i32
    %c0_i32_0 = arith.constant 0 : i32
    return %arg1, %c0_i32 : i32, i32
  }
  func.func @transform_4(%arg0: i32, %arg1: i32) -> (i32, i32) {
    %c0_i32 = arith.constant 0 : i32
    %c0_i32_0 = arith.constant 0 : i32
    %c0_i32_1 = arith.constant 0 : i32
    return %c0_i32, %c0_i32_0 : i32, i32
  }
  func.func @transform_5(%arg0: i32, %arg1: i32) -> (i32, i32) {
    %c0_i32 = arith.constant 0 : i32
    %c0_i32_0 = arith.constant 0 : i32
    return %arg0, %c0_i32 : i32, i32
  }
}

</mosaic_0001>

<llo_original>
// kernel: tpu_custom_call.1
$region0: #{tpu_custom_call.1}
  #allocation0 [shape = 'u32[]', space=smem, size = 0x4, offset = 0x4, fixed_abs, tag = 'smem constant byte address 0x4 - core index']
  #allocation1 [shape = 'u32[72,128]{1,0:T(1,128)}', space=vmem, size = 0x9000, scoped, tag = 'internal scratch']
  #allocation2 [shape = 'f32[16,128]{1,0:T(8,128)}', space=vmem, size = 0x2000, scoped, tag = 'scratch operand']
  %s0 = inlined_call_operand.hbm [shape: f32[16,128], index: 0, kind: input, shape index: {}]
  %s1 = inlined_call_operand.hbm [shape: bf16[128,128], index: 1, kind: input, shape index: {}]
  %s2 = inlined_call_operand.vmem [shape: f32[1,128], index: 2, kind: input, shape index: {}]
  %s3 = inlined_call_operand.hbm [shape: bf16[128,128], index: 3, kind: input, shape index: {}]
  %s4 = inlined_call_operand.vmem [shape: f32[1,128], index: 4, kind: input, shape index: {}]
  %s5 = inlined_call_operand.hbm [shape: bf16[16,128], index: 5, kind: output, shape index: {}]
  %s6 = sld [smem:[#allocation0]]
  $region50: #{tpu_custom_call.1} parent=0
    _
  %s8 = ssub.s32 1, %s6
  %s9 = scalar_select 0, %s8, %s6
  $region1: #{tpu_custom_call.1} parent=0
    #allocation3 [shape = 'u8[8192]{0}', space=vmem, size = 0x2000, scoped, tag = 'input window, operand 0, single buffered']
    #allocation4 [shape = 's32[1]{0}', space=sflag, size = 0x4, scoped, tag = 'scoped memory for tpu_custom_call.1']
    #allocation5 [shape = 's32[1]{0}', space=sflag, size = 0x4, scoped, tag = 'scoped memory for tpu_custom_call.1']
    #allocation6 [shape = 'u8[32768]{0}', space=vmem, size = 0x8000, scoped, tag = 'input window, operand 1, single buffered']
    #allocation7 [shape = 's32[1]{0}', space=sflag, size = 0x4, scoped, tag = 'scoped memory for tpu_custom_call.1']
    #allocation8 [shape = 'u8[32768]{0}', space=vmem, size = 0x8000, scoped, tag = 'input window, operand 3, single buffered']
    #allocation9 [shape = 'u8[4096]{0}', space=vmem, size = 0x1000, scoped, tag = 'output window, operand 0, single buffered']
    %10 = vsyncpa [#allocation4], 0
    %11 = vsyncpa [#allocation7], 0
    %12 = vsyncpa [#allocation5], 0
    // Predicated region
    $region2: #{tpu_custom_call.1} parent=1 // pred_check
      _
    $region3: #{tpu_custom_call.1} parent=1 // pred_check_branch
      %14 = sbr.rel (0) target = $region5
    $region4: #{tpu_custom_call.1} parent=1 // pred_region
      %16 = vsyncadd [#allocation4], 0
      %s17 = sshll.u32 %s0, 4
      %s18 = int_to_ptr.hbm [resolvable:$true] %s17
      %s19 = sshll.u32 [#allocation3], 4
      %s20 = int_to_ptr.vmem [resolvable:$true] %s19
      %25 = dma.hbm_to_vmem [thread:$0]  %s18, 256, %s20, [#allocation4], 128, 128, 8
    $region5: #{tpu_custom_call.1} parent=1 // pred_fallthru
      _
    // Predicated region
    $region6: #{tpu_custom_call.1} parent=1 // pred_check
      _
    $region7: #{tpu_custom_call.1} parent=1 // pred_check_branch
      %27 = sbr.rel (0) target = $region9
    $region8: #{tpu_custom_call.1} parent=1 // pred_region
      %29 = vsyncadd [#allocation7], 0
      %s30 = sshll.u32 %s1, 4
      %s31 = int_to_ptr.hbm [resolvable:$true] %s30
      %s32 = sshll.u32 [#allocation6], 4
      %s33 = int_to_ptr.vmem [resolvable:$true] %s32
      %38 = dma.hbm_to_vmem [thread:$0]  %s31, 1024, %s33, [#allocation7], 64, 64, 4
    $region9: #{tpu_custom_call.1} parent=1 // pred_fallthru
      _
    // Predicated region
    $region10: #{tpu_custom_call.1} parent=1 // pred_check
      _
    $region11: #{tpu_custom_call.1} parent=1 // pred_check_branch
      %40 = sbr.rel (0) target = $region13
    $region12: #{tpu_custom_call.1} parent=1 // pred_region
      _
    $region13: #{tpu_custom_call.1} parent=1 // pred_fallthru
      _
    // Predicated region
    $region14: #{tpu_custom_call.1} parent=1 // pred_check
      _
    $region15: #{tpu_custom_call.1} parent=1 // pred_check_branch
      %42 = sbr.rel (0) target = $region17
    $region16: #{tpu_custom_call.1} parent=1 // pred_region
      %44 = vsyncadd [#allocation7], 0
      %s45 = sshll.u32 %s3, 4
      %s46 = int_to_ptr.hbm [resolvable:$true] %s45
      %s47 = sshll.u32 [#allocation8], 4
      %s48 = int_to_ptr.vmem [resolvable:$true] %s47
      %53 = dma.hbm_to_vmem [thread:$0]  %s46, 1024, %s48, [#allocation7], 64, 64, 4
    $region17: #{tpu_custom_call.1} parent=1 // pred_fallthru
      _
    // Predicated region
    $region18: #{tpu_custom_call.1} parent=1 // pred_check
      _
    $region19: #{tpu_custom_call.1} parent=1 // pred_check_branch
      %55 = sbr.rel (0) target = $region21
    $region20: #{tpu_custom_call.1} parent=1 // pred_region
      _
    $region21: #{tpu_custom_call.1} parent=1 // pred_fallthru
      _
    // Predicated region
    $region22: #{tpu_custom_call.1} parent=1 // pred_check
      _
    $region23: #{tpu_custom_call.1} parent=1 // pred_check_branch
      %57 = sbr.rel (0) target = $region25
    $region24: #{tpu_custom_call.1} parent=1 // pred_region
      %59 = dma.done [#allocation4], 256
    $region25: #{tpu_custom_call.1} parent=1 // pred_fallthru
      _
    // Predicated region
    $region26: #{tpu_custom_call.1} parent=1 // pred_check
      _
    $region27: #{tpu_custom_call.1} parent=1 // pred_check_branch
      %61 = sbr.rel (0) target = $region29
    $region28: #{tpu_custom_call.1} parent=1 // pred_region
      %63 = dma.done [#allocation7], 1024
    $region29: #{tpu_custom_call.1} parent=1 // pred_fallthru
      _
    // Predicated region
    $region30: #{tpu_custom_call.1} parent=1 // pred_check
      _
    $region31: #{tpu_custom_call.1} parent=1 // pred_check_branch
      %65 = sbr.rel (0) target = $region33
    $region32: #{tpu_custom_call.1} parent=1 // pred_region
      %67 = dma.done [#allocation7], 1024
    $region33: #{tpu_custom_call.1} parent=1 // pred_fallthru
      _
    %p68 = scmp.eq.s32.totalorder 0, 0
    // Predicated region
    $region34: #{tpu_custom_call.1} parent=1 // pred_check
      %p69 = pneg %p68
    $region35: #{tpu_custom_call.1} parent=1 // pred_check_branch
      %71 = sbr.rel (%p69) target = $region37
    $region36: #{tpu_custom_call.1} parent=1 // pred_region
      %72 = vst [vmem:[#allocation2] sm:$0xff] 0.0
      %73 = vst [vmem:[#allocation2 + $0x8] sm:$0xff] 0.0
    $region37: #{tpu_custom_call.1} parent=1 // pred_fallthru
      _
    %v74 = vld [vmem:[#allocation3] sm:$0xff]
    %v75 = vld [vmem:[#allocation3 + $0x8] sm:$0xff]
    %v76 = vpack.c.bf16 %v75, %v74
    %v77 = vld [vmem:[#allocation6] sm:$0xf]
    %v78 = vld [vmem:[#allocation6 + $0x4] sm:$0xf]
    %v79 = vld [vmem:[#allocation6 + $0x8] sm:$0xf]
    %v80 = vld [vmem:[#allocation6 + $0xc] sm:$0xf]
    %v81 = vld [vmem:[#allocation6 + $0x10] sm:$0xf]
    %v82 = vld [vmem:[#allocation6 + $0x14] sm:$0xf]
    %v83 = vld [vmem:[#allocation6 + $0x18] sm:$0xf]
    %v84 = vld [vmem:[#allocation6 + $0x1c] sm:$0xf]
    %v85 = vld [vmem:[#allocation6 + $0x20] sm:$0xf]
    %v86 = vld [vmem:[#allocation6 + $0x24] sm:$0xf]
    %v87 = vld [vmem:[#allocation6 + $0x28] sm:$0xf]
    %v88 = vld [vmem:[#allocation6 + $0x2c] sm:$0xf]
    %v89 = vld [vmem:[#allocation6 + $0x30] sm:$0xf]
    %v90 = vld [vmem:[#allocation6 + $0x34] sm:$0xf]
    %v91 = vld [vmem:[#allocation6 + $0x38] sm:$0xf]
    %v92 = vld [vmem:[#allocation6 + $0x3c] sm:$0xf]
    %v93 = vld [vmem:[%s2] sm:$0x1]
    %v95 = vperm.slane %v93, 0
    %v113 = vunpack.c.l.b16 %v77
    %v114 = vunpack.c.l.b16 %v78
    %v115 = vunpack.c.l.b16 %v79
    %v116 = vunpack.c.l.b16 %v80
    %v117 = vunpack.c.l.b16 %v81
    %v118 = vunpack.c.l.b16 %v82
    %v119 = vunpack.c.l.b16 %v83
    %v120 = vunpack.c.l.b16 %v84
    %v121 = vunpack.c.l.b16 %v85
    %v122 = vunpack.c.l.b16 %v86
    %v123 = vunpack.c.l.b16 %v87
    %v124 = vunpack.c.l.b16 %v88
    %v125 = vunpack.c.l.b16 %v89
    %v126 = vunpack.c.l.b16 %v90
    %v127 = vunpack.c.l.b16 %v91
    %v128 = vunpack.c.l.b16 %v92
    %v129 = vpack.c.b16 %v114, %v113
    %v130 = vpack.c.b16 %v116, %v115
    %v131 = vpack.c.b16 %v118, %v117
    %v132 = vpack.c.b16 %v120, %v119
    %v133 = vpack.c.b16 %v122, %v121
    %v134 = vpack.c.b16 %v124, %v123
    %v135 = vpack.c.b16 %v126, %v125
    %v136 = vpack.c.b16 %v128, %v127
    %145 = vmatpush.bf16.msra.mxu0 %v136
    %146 = vmatpush.bf16.msra.mxu0 %v135
    %147 = vmatpush.bf16.msra.mxu0 %v134
    %148 = vmatpush.bf16.msra.mxu0 %v133
    %149 = vmatpush.bf16.msra.mxu0 %v132
    %150 = vmatpush.bf16.msra.mxu0 %v131
    %151 = vmatpush.bf16.msra.mxu0 %v130
    %152 = vmatpush.bf16.msra.mxu0 %v129
    %153 = vmatmul.bf16.gmra.mxu0 %v76
    %v154 = vpop.f32.mrf.mxu0
    %v155 = vadd.f32 %v95, %v154
    %v156 = vpop.f32.mrf.mxu0
    %v157 = vadd.f32 %v95, %v156
    %158 = vdwg.mxu0
    %v159 = vmax.f32 %v155, 0.0
    %v160 = vmax.f32 %v157, 0.0
    %v161 = vpack.c.bf16 %v160, %v159
    %v162 = vld [vmem:[#allocation2] sm:$0xff]
    %v163 = vld [vmem:[#allocation2 + $0x8] sm:$0xff]
    %v164 = vld [vmem:[#allocation8] sm:$0xf]
    %v165 = vld [vmem:[#allocation8 + $0x4] sm:$0xf]
    %v166 = vld [vmem:[#allocation8 + $0x8] sm:$0xf]
    %v167 = vld [vmem:[#allocation8 + $0xc] sm:$0xf]
    %v168 = vld [vmem:[#allocation8 + $0x10] sm:$0xf]
    %v169 = vld [vmem:[#allocation8 + $0x14] sm:$0xf]
    %v170 = vld [vmem:[#allocation8 + $0x18] sm:$0xf]
    %v171 = vld [vmem:[#allocation8 + $0x1c] sm:$0xf]
    %v172 = vld [vmem:[#allocation8 + $0x20] sm:$0xf]
    %v173 = vld [vmem:[#allocation8 + $0x24] sm:$0xf]
    %v174 = vld [vmem:[#allocation8 + $0x28] sm:$0xf]
    %v175 = vld [vmem:[#allocation8 + $0x2c] sm:$0xf]
    %v176 = vld [vmem:[#allocation8 + $0x30] sm:$0xf]
    %v177 = vld [vmem:[#allocation8 + $0x34] sm:$0xf]
    %v178 = vld [vmem:[#allocation8 + $0x38] sm:$0xf]
    %v179 = vld [vmem:[#allocation8 + $0x3c] sm:$0xf]
    %v196 = vunpack.c.l.b16 %v164
    %v197 = vunpack.c.l.b16 %v165
    %v198 = vunpack.c.l.b16 %v166
    %v199 = vunpack.c.l.b16 %v167
    %v200 = vunpack.c.l.b16 %v168
    %v201 = vunpack.c.l.b16 %v169
    %v202 = vunpack.c.l.b16 %v170
    %v203 = vunpack.c.l.b16 %v171
    %v204 = vunpack.c.l.b16 %v172
    %v205 = vunpack.c.l.b16 %v173
    %v206 = vunpack.c.l.b16 %v174
    %v207 = vunpack.c.l.b16 %v175
    %v208 = vunpack.c.l.b16 %v176
    %v209 = vunpack.c.l.b16 %v177
    %v210 = vunpack.c.l.b16 %v178
    %v211 = vunpack.c.l.b16 %v179
    %v212 = vpack.c.b16 %v197, %v196
    %v213 = vpack.c.b16 %v199, %v198
    %v214 = vpack.c.b16 %v201, %v200
    %v215 = vpack.c.b16 %v203, %v202
    %v216 = vpack.c.b16 %v205, %v204
    %v217 = vpack.c.b16 %v207, %v206
    %v218 = vpack.c.b16 %v209, %v208
    %v219 = vpack.c.b16 %v211, %v210
    %228 = vmatpush.bf16.msra.mxu0 %v219
    %229 = vmatpush.bf16.msra.mxu0 %v218
    %230 = vmatpush.bf16.msra.mxu0 %v217
    %231 = vmatpush.bf16.msra.mxu0 %v216
    %232 = vmatpush.bf16.msra.mxu0 %v215
    %233 = vmatpush.bf16.msra.mxu0 %v214
    %234 = vmatpush.bf16.msra.mxu0 %v213
    %235 = vmatpush.bf16.msra.mxu0 %v212
    %236 = vmatmul.bf16.gmra.mxu0 %v161
    %v237 = vpop.f32.mrf.mxu0
    %v238 = vadd.f32 0.0, %v237
    %v239 = vpop.f32.mrf.mxu0
    %v240 = vadd.f32 0.0, %v239
    %241 = vdwg.mxu0
    %v242 = vadd.f32 %v162, %v238
    %v243 = vadd.f32 %v163, %v240
    %244 = vst [vmem:[#allocation2] sm:$0xff] %v242
    %245 = vst [vmem:[#allocation2 + $0x8] sm:$0xff] %v243
    // Predicated region
    $region38: #{tpu_custom_call.1} parent=1 // pred_check
      %p246 = pneg %p68
    $region39: #{tpu_custom_call.1} parent=1 // pred_check_branch
      %248 = sbr.rel (%p246) target = $region41
    $region40: #{tpu_custom_call.1} parent=1 // pred_region
      %v249 = vld [vmem:[#allocation2] sm:$0xff]
      %v250 = vld [vmem:[#allocation2 + $0x8] sm:$0xff]
      %v251 = vld [vmem:[%s4] sm:$0x1]
      %v253 = vperm.slane %v251, 0
      %v255 = vadd.f32 %v249, %v253
      %v256 = vadd.f32 %v250, %v253
      %v257 = vpack.c.bf16 %v255, %v255
      %v258 = vpack.c.bf16 %v256, %v256
      %259 = vst [vmem:[#allocation9] sm:$0xf] %v257
      %260 = vst [vmem:[#allocation9 + $0x4] sm:$0xf] %v258
    $region41: #{tpu_custom_call.1} parent=1 // pred_fallthru
      _
    // Predicated region
    $region42: #{tpu_custom_call.1} parent=1 // pred_check
      _
    $region43: #{tpu_custom_call.1} parent=1 // pred_check_branch
      %262 = sbr.rel (0) target = $region45
    $region44: #{tpu_custom_call.1} parent=1 // pred_region
      %264 = vsyncadd [#allocation5], 0
      %s265 = sshll.u32 [#allocation9], 4
      %s266 = int_to_ptr.vmem [resolvable:$true] %s265
      %s267 = sshll.u32 %s5, 4
      %s268 = int_to_ptr.hbm [resolvable:$true] %s267
      %273 = dma.vmem_to_hbm [thread:$0]  %s266, 128, %s268, [#allocation5], 64, 64, 4
    $region45: #{tpu_custom_call.1} parent=1 // pred_fallthru
      _
    // Predicated region
    $region46: #{tpu_custom_call.1} parent=1 // pred_check
      _
    $region47: #{tpu_custom_call.1} parent=1 // pred_check_branch
      %275 = sbr.rel (0) target = $region49
    $region48: #{tpu_custom_call.1} parent=1 // pred_region
      %277 = dma.done [#allocation5], 128
    $region49: #{tpu_custom_call.1} parent=1 // pred_fallthru
      _
    %278 = vsyncpa [#allocation4], 1
    %279 = vsyncpa [#allocation7], 1
    %280 = vsyncpa [#allocation5], 1

// kernel: tpu_custom_call.1
$region0: #{tpu_custom_call.1}
  #allocation0 [shape = 'u32[]', space=smem, size = 0x4, offset = 0x4, fixed_abs, tag = 'smem constant byte address 0x4 - core index']
  #allocation1 [shape = 'u32[72,128]{1,0:T(1,128)}', space=vmem, size = 0x9000, scoped, tag = 'internal scratch']
  #allocation2 [shape = 'f32[16,128]{1,0:T(8,128)}', space=vmem, size = 0x2000, scoped, tag = 'scratch operand']
  %s0 = inlined_call_operand.hbm [shape: f32[16,128], index: 0, kind: input, shape index: {}]
  %s1 = inlined_call_operand.hbm [shape: bf16[128,128], index: 1, kind: input, shape index: {}]
  %s2 = inlined_call_operand.vmem [shape: f32[1,128], index: 2, kind: input, shape index: {}]
  %s3 = inlined_call_operand.hbm [shape: bf16[128,128], index: 3, kind: input, shape index: {}]
  %s4 = inlined_call_operand.vmem [shape: f32[1,128], index: 4, kind: input, shape index: {}]
  %s5 = inlined_call_operand.hbm [shape: bf16[16,128], index: 5, kind: output, shape index: {}]
  %s6 = sld [smem:[#allocation0]]
  $region50: #{tpu_custom_call.1} parent=0
    _
  %s8 = ssub.s32 1, %s6
  %s9 = scalar_select 0, %s8, %s6
  $region1: #{tpu_custom_call.1} parent=0
    #allocation3 [shape = 'u8[8192]{0}', space=vmem, size = 0x2000, scoped, tag = 'input window, operand 0, single buffered']
    #allocation4 [shape = 's32[1]{0}', space=sflag, size = 0x4, scoped, tag = 'scoped memory for tpu_custom_call.1']
    #allocation5 [shape = 's32[1]{0}', space=sflag, size = 0x4, scoped, tag = 'scoped memory for tpu_custom_call.1']
    #allocation6 [shape = 'u8[32768]{0}', space=vmem, size = 0x8000, scoped, tag = 'input window, operand 1, single buffered']
    #allocation7 [shape = 's32[1]{0}', space=sflag, size = 0x4, scoped, tag = 'scoped memory for tpu_custom_call.1']
    #allocation8 [shape = 'u8[32768]{0}', space=vmem, size = 0x8000, scoped, tag = 'input window, operand 3, single buffered']
    #allocation9 [shape = 'u8[4096]{0}', space=vmem, size = 0x1000, scoped, tag = 'output window, operand 0, single buffered']
    %10 = vsyncpa [#allocation4], 0
    %11 = vsyncpa [#allocation7], 0
    %12 = vsyncpa [#allocation5], 0
    // Predicated region
    $region2: #{tpu_custom_call.1} parent=1 // pred_check
      _
    $region3: #{tpu_custom_call.1} parent=1 // pred_check_branch
      %14 = sbr.rel (0) target = $region5
    $region4: #{tpu_custom_call.1} parent=1 // pred_region
      %16 = vsyncadd [#allocation4], 0
      %s17 = sshll.u32 %s0, 4
      %s18 = int_to_ptr.hbm [resolvable:$true] %s17
      %s19 = sshll.u32 [#allocation3], 4
      %s20 = int_to_ptr.vmem [resolvable:$true] %s19
      %25 = dma.hbm_to_vmem [thread:$0]  %s18, 256, %s20, [#allocation4], 128, 128, 8
    $region5: #{tpu_custom_call.1} parent=1 // pred_fallthru
      _
    // Predicated region
    $region6: #{tpu_custom_call.1} parent=1 // pred_check
      _
    $region7: #{tpu_custom_call.1} parent=1 // pred_check_branch
      %27 = sbr.rel (0) target = $region9
    $region8: #{tpu_custom_call.1} parent=1 // pred_region
      %29 = vsyncadd [#allocation7], 0
      %s30 = sshll.u32 %s1, 4
      %s31 = int_to_ptr.hbm [resolvable:$true] %s30
      %s32 = sshll.u32 [#allocation6], 4
      %s33 = int_to_ptr.vmem [resolvable:$true] %s32
      %38 = dma.hbm_to_vmem [thread:$0]  %s31, 1024, %s33, [#allocation7], 64, 64, 4
    $region9: #{tpu_custom_call.1} parent=1 // pred_fallthru
      _
    // Predicated region
    $region10: #{tpu_custom_call.1} parent=1 // pred_check
      _
    $region11: #{tpu_custom_call.1} parent=1 // pred_check_branch
      %40 = sbr.rel (0) target = $region13
    $region12: #{tpu_custom_call.1} parent=1 // pred_region
      _
    $region13: #{tpu_custom_call.1} parent=1 // pred_fallthru
      _
    // Predicated region
    $region14: #{tpu_custom_call.1} parent=1 // pred_check
      _
    $region15: #{tpu_custom_call.1} parent=1 // pred_check_branch
      %42 = sbr.rel (0) target = $region17
    $region16: #{tpu_custom_call.1} parent=1 // pred_region
      %44 = vsyncadd [#allocation7], 0
      %s45 = sshll.u32 %s3, 4
      %s46 = int_to_ptr.hbm [resolvable:$true] %s45
      %s47 = sshll.u32 [#allocation8], 4
      %s48 = int_to_ptr.vmem [resolvable:$true] %s47
      %53 = dma.hbm_to_vmem [thread:$0]  %s46, 1024, %s48, [#allocation7], 64, 64, 4
    $region17: #{tpu_custom_call.1} parent=1 // pred_fallthru
      _
    // Predicated region
    $region18: #{tpu_custom_call.1} parent=1 // pred_check
      _
    $region19: #{tpu_custom_call.1} parent=1 // pred_check_branch
      %55 = sbr.rel (0) target = $region21
    $region20: #{tpu_custom_call.1} parent=1 // pred_region
      _
    $region21: #{tpu_custom_call.1} parent=1 // pred_fallthru
      _
    // Predicated region
    $region22: #{tpu_custom_call.1} parent=1 // pred_check
      _
    $region23: #{tpu_custom_call.1} parent=1 // pred_check_branch
      %57 = sbr.rel (0) target = $region25
    $region24: #{tpu_custom_call.1} parent=1 // pred_region
      %59 = dma.done [#allocation4], 256
    $region25: #{tpu_custom_call.1} parent=1 // pred_fallthru
      _
    // Predicated region
    $region26: #{tpu_custom_call.1} parent=1 // pred_check
      _
    $region27: #{tpu_custom_call.1} parent=1 // pred_check_branch
      %61 = sbr.rel (0) target = $region29
    $region28: #{tpu_custom_call.1} parent=1 // pred_region
      %63 = dma.done [#allocation7], 1024
    $region29: #{tpu_custom_call.1} parent=1 // pred_fallthru
      _
    // Predicated region
    $region30: #{tpu_custom_call.1} parent=1 // pred_check
      _
    $region31: #{tpu_custom_call.1} parent=1 // pred_check_branch
      %65 = sbr.rel (0) target = $region33
    $region32: #{tpu_custom_call.1} parent=1 // pred_region
      %67 = dma.done [#allocation7], 1024
    $region33: #{tpu_custom_call.1} parent=1 // pred_fallthru
      _
    %p68 = scmp.eq.s32.totalorder 0, 0
    // Predicated region
    $region34: #{tpu_custom_call.1} parent=1 // pred_check
      %p69 = pneg %p68
    $region35: #{tpu_custom_call.1} parent=1 // pred_check_branch
      %71 = sbr.rel (%p69) target = $region37
    $region36: #{tpu_custom_call.1} parent=1 // pred_region
      %72 = vst [vmem:[#allocation2] sm:$0xff] 0.0
      %73 = vst [vmem:[#allocation2 + $0x8] sm:$0xff] 0.0
    $region37: #{tpu_custom_call.1} parent=1 // pred_fallthru
      _
    %v74 = vld [vmem:[#allocation3] sm:$0xff]
    %v75 = vld [vmem:[#allocation3 + $0x8] sm:$0xff]
    %v76 = vpack.c.bf16 %v75, %v74
    %v77 = vld [vmem:[#allocation6] sm:$0xf]
    %v78 = vld [vmem:[#allocation6 + $0x4] sm:$0xf]
    %v79 = vld [vmem:[#allocation6 + $0x8] sm:$0xf]
    %v80 = vld [vmem:[#allocation6 + $0xc] sm:$0xf]
    %v81 = vld [vmem:[#allocation6 + $0x10] sm:$0xf]
    %v82 = vld [vmem:[#allocation6 + $0x14] sm:$0xf]
    %v83 = vld [vmem:[#allocation6 + $0x18] sm:$0xf]
    %v84 = vld [vmem:[#allocation6 + $0x1c] sm:$0xf]
    %v85 = vld [vmem:[#allocation6 + $0x20] sm:$0xf]
    %v86 = vld [vmem:[#allocation6 + $0x24] sm:$0xf]
    %v87 = vld [vmem:[#allocation6 + $0x28] sm:$0xf]
    %v88 = vld [vmem:[#allocation6 + $0x2c] sm:$0xf]
    %v89 = vld [vmem:[#allocation6 + $0x30] sm:$0xf]
    %v90 = vld [vmem:[#allocation6 + $0x34] sm:$0xf]
    %v91 = vld [vmem:[#allocation6 + $0x38] sm:$0xf]
    %v92 = vld [vmem:[#allocation6 + $0x3c] sm:$0xf]
    %v93 = vld [vmem:[%s2] sm:$0x1]
    %v95 = vperm.slane %v93, 0
    %v113 = vunpack.c.l.b16 %v77
    %v114 = vunpack.c.l.b16 %v78
    %v115 = vunpack.c.l.b16 %v79
    %v116 = vunpack.c.l.b16 %v80
    %v117 = vunpack.c.l.b16 %v81
    %v118 = vunpack.c.l.b16 %v82
    %v119 = vunpack.c.l.b16 %v83
    %v120 = vunpack.c.l.b16 %v84
    %v121 = vunpack.c.l.b16 %v85
    %v122 = vunpack.c.l.b16 %v86
    %v123 = vunpack.c.l.b16 %v87
    %v124 = vunpack.c.l.b16 %v88
    %v125 = vunpack.c.l.b16 %v89
    %v126 = vunpack.c.l.b16 %v90
    %v127 = vunpack.c.l.b16 %v91
    %v128 = vunpack.c.l.b16 %v92
    %v129 = vpack.c.b16 %v114, %v113
    %v130 = vpack.c.b16 %v116, %v115
    %v131 = vpack.c.b16 %v118, %v117
    %v132 = vpack.c.b16 %v120, %v119
    %v133 = vpack.c.b16 %v122, %v121
    %v134 = vpack.c.b16 %v124, %v123
    %v135 = vpack.c.b16 %v126, %v125
    %v136 = vpack.c.b16 %v128, %v127
    %145 = vmatpush.bf16.msra.mxu0 %v136
    %146 = vmatpush.bf16.msra.mxu0 %v135
    %147 = vmatpush.bf16.msra.mxu0 %v134
    %148 = vmatpush.bf16.msra.mxu0 %v133
    %149 = vmatpush.bf16.msra.mxu0 %v132
    %150 = vmatpush.bf16.msra.mxu0 %v131
    %151 = vmatpush.bf16.msra.mxu0 %v130
    %152 = vmatpush.bf16.msra.mxu0 %v129
    %153 = vmatmul.bf16.gmra.mxu0 %v76
    %v154 = vpop.f32.mrf.mxu0
    %v155 = vadd.f32 %v95, %v154
    %v156 = vpop.f32.mrf.mxu0
    %v157 = vadd.f32 %v95, %v156
    %158 = vdwg.mxu0
    %v159 = vmax.f32 %v155, 0.0
    %v160 = vmax.f32 %v157, 0.0
    %v161 = vpack.c.bf16 %v160, %v159
    %v162 = vld [vmem:[#allocation2] sm:$0xff]
    %v163 = vld [vmem:[#allocation2 + $0x8] sm:$0xff]
    %v164 = vld [vmem:[#allocation8] sm:$0xf]
    %v165 = vld [vmem:[#allocation8 + $0x4] sm:$0xf]
    %v166 = vld [vmem:[#allocation8 + $0x8] sm:$0xf]
    %v167 = vld [vmem:[#allocation8 + $0xc] sm:$0xf]
    %v168 = vld [vmem:[#allocation8 + $0x10] sm:$0xf]
    %v169 = vld [vmem:[#allocation8 + $0x14] sm:$0xf]
    %v170 = vld [vmem:[#allocation8 + $0x18] sm:$0xf]
    %v171 = vld [vmem:[#allocation8 + $0x1c] sm:$0xf]
    %v172 = vld [vmem:[#allocation8 + $0x20] sm:$0xf]
    %v173 = vld [vmem:[#allocation8 + $0x24] sm:$0xf]
    %v174 = vld [vmem:[#allocation8 + $0x28] sm:$0xf]
    %v175 = vld [vmem:[#allocation8 + $0x2c] sm:$0xf]
    %v176 = vld [vmem:[#allocation8 + $0x30] sm:$0xf]
    %v177 = vld [vmem:[#allocation8 + $0x34] sm:$0xf]
    %v178 = vld [vmem:[#allocation8 + $0x38] sm:$0xf]
    %v179 = vld [vmem:[#allocation8 + $0x3c] sm:$0xf]
    %v196 = vunpack.c.l.b16 %v164
    %v197 = vunpack.c.l.b16 %v165
    %v198 = vunpack.c.l.b16 %v166
    %v199 = vunpack.c.l.b16 %v167
    %v200 = vunpack.c.l.b16 %v168
    %v201 = vunpack.c.l.b16 %v169
    %v202 = vunpack.c.l.b16 %v170
    %v203 = vunpack.c.l.b16 %v171
    %v204 = vunpack.c.l.b16 %v172
    %v205 = vunpack.c.l.b16 %v173
    %v206 = vunpack.c.l.b16 %v174
    %v207 = vunpack.c.l.b16 %v175
    %v208 = vunpack.c.l.b16 %v176
    %v209 = vunpack.c.l.b16 %v177
    %v210 = vunpack.c.l.b16 %v178
    %v211 = vunpack.c.l.b16 %v179
    %v212 = vpack.c.b16 %v197, %v196
    %v213 = vpack.c.b16 %v199, %v198
    %v214 = vpack.c.b16 %v201, %v200
    %v215 = vpack.c.b16 %v203, %v202
    %v216 = vpack.c.b16 %v205, %v204
    %v217 = vpack.c.b16 %v207, %v206
    %v218 = vpack.c.b16 %v209, %v208
    %v219 = vpack.c.b16 %v211, %v210
    %228 = vmatpush.bf16.msra.mxu0 %v219
    %229 = vmatpush.bf16.msra.mxu0 %v218
    %230 = vmatpush.bf16.msra.mxu0 %v217
    %231 = vmatpush.bf16.msra.mxu0 %v216
    %232 = vmatpush.bf16.msra.mxu0 %v215
    %233 = vmatpush.bf16.msra.mxu0 %v214
    %234 = vmatpush.bf16.msra.mxu0 %v213
    %235 = vmatpush.bf16.msra.mxu0 %v212
    %236 = vmatmul.bf16.gmra.mxu0 %v161
    %v237 = vpop.f32.mrf.mxu0
    %v238 = vadd.f32 0.0, %v237
    %v239 = vpop.f32.mrf.mxu0
    %v240 = vadd.f32 0.0, %v239
    %241 = vdwg.mxu0
    %v242 = vadd.f32 %v162, %v238
    %v243 = vadd.f32 %v163, %v240
    %244 = vst [vmem:[#allocation2] sm:$0xff] %v242
    %245 = vst [vmem:[#allocation2 + $0x8] sm:$0xff] %v243
    // Predicated region
    $region38: #{tpu_custom_call.1} parent=1 // pred_check
      %p246 = pneg %p68
    $region39: #{tpu_custom_call.1} parent=1 // pred_check_branch
      %248 = sbr.rel (%p246) target = $region41
    $region40: #{tpu_custom_call.1} parent=1 // pred_region
      %v249 = vld [vmem:[#allocation2] sm:$0xff]
      %v250 = vld [vmem:[#allocation2 + $0x8] sm:$0xff]
      %v251 = vld [vmem:[%s4] sm:$0x1]
      %v253 = vperm.slane %v251, 0
      %v255 = vadd.f32 %v249, %v253
      %v256 = vadd.f32 %v250, %v253
      %v257 = vpack.c.bf16 %v255, %v255
      %v258 = vpack.c.bf16 %v256, %v256
      %259 = vst [vmem:[#allocation9] sm:$0xf] %v257
      %260 = vst [vmem:[#allocation9 + $0x4] sm:$0xf] %v258
    $region41: #{tpu_custom_call.1} parent=1 // pred_fallthru
      _
    // Predicated region
    $region42: #{tpu_custom_call.1} parent=1 // pred_check
      _
    $region43: #{tpu_custom_call.1} parent=1 // pred_check_branch
      %262 = sbr.rel (0) target = $region45
    $region44: #{tpu_custom_call.1} parent=1 // pred_region
      %264 = vsyncadd [#allocation5], 0
      %s265 = sshll.u32 [#allocation9], 4
      %s266 = int_to_ptr.vmem [resolvable:$true] %s265
      %s267 = sshll.u32 %s5, 4
      %s268 = int_to_ptr.hbm [resolvable:$true] %s267
      %273 = dma.vmem_to_hbm [thread:$0]  %s266, 128, %s268, [#allocation5], 64, 64, 4
    $region45: #{tpu_custom_call.1} parent=1 // pred_fallthru
      _
    // Predicated region
    $region46: #{tpu_custom_call.1} parent=1 // pred_check
      _
    $region47: #{tpu_custom_call.1} parent=1 // pred_check_branch
      %275 = sbr.rel (0) target = $region49
    $region48: #{tpu_custom_call.1} parent=1 // pred_region
      %277 = dma.done [#allocation5], 128
    $region49: #{tpu_custom_call.1} parent=1 // pred_fallthru
      _
    %278 = vsyncpa [#allocation4], 1
    %279 = vsyncpa [#allocation7], 1
    %280 = vsyncpa [#allocation5], 1

</llo_original>
